<compile_context>
chip_gen: v5e
topology: v5e:2x2
jax: 0.10.0
libtpu: 0.0.40
codegen_flags: <defaults>
</compile_context>

<pallas_src>
import functools

import jax
import jax.numpy as jnp
from jax.experimental import pallas as pl
from jax.experimental.pallas import tpu as pltpu

EPS = 1e-5
LANE = 128


def _round_up(n, m):
    return (n + m - 1) // m * m


def _tpu_kind():
    try:
        return jax.devices()[0].device_kind.lower()
    except Exception:  # pragma: no cover - defensive only
        return ""


def _default_vmem_limit_bytes(kind):
    # v7x: 64 MiB physical VMEM per TensorCore -> stay well under it.
    if "v7" in kind or "7x" in kind:
        return 48 << 20
    # v5e / v6e: 128 MiB physical, but the scoped default (16/32 MiB) throttles
    # tile sizes -> raise it.
    if "v5" in kind or "v6" in kind:
        return 100 << 20
    # Unknown / older parts: leave the compiler default.
    return None


def _default_proj_splits(kind, proj_pad):
    # v7x has 2 TensorCores per chip: keep >=2 iterations on the "parallel"
    # axis (this duplicates the x@w1 FLOPs, but they run concurrently, so wall
    # time ~ first matmul + half of everything else).  On 1-TC parts (v5e/v6e)
    # a second proj tile is pure recompute, so keep num_j = 1 there.
    if ("v7" in kind or "7x" in kind) and proj_pad >= 2 * LANE:
        return 2
    return 1


def mlp_head_kernel(x_ref, w1_ref, gamma_ref, beta_ref, w2_ref, b2_ref, out_ref):
    k = pl.program_id(1)

    @pl.when(k == 0)
    def _():
        out_ref[...] = jnp.zeros_like(out_ref)

    # ---- Linear 1, one hidden-column slab: [B, in] @ [in, Th] (MXU, f32 acc) ----
    h = jnp.dot(x_ref[...], w1_ref[...], preferred_element_type=jnp.float32)
    # b1 intentionally omitted: training-mode BatchNorm subtracts the batch mean
    # right after this matmul, which cancels a per-feature pre-BN bias exactly.

    # ---- BatchNorm1d (training mode: batch stats, biased variance), one pass ----
    inv_n = 1.0 / jnp.float32(h.shape[0])
    mean = jnp.sum(h, axis=0, keepdims=True) * inv_n              # [1, Th]
    mean_sq = jnp.sum(h * h, axis=0, keepdims=True) * inv_n       # [1, Th]
    var = jnp.maximum(mean_sq - mean * mean, 0.0)                 # [1, Th]
    scale = jax.lax.rsqrt(var + EPS) * gamma_ref[...]             # gamma folded (EUP rsqrt)
    shift = beta_ref[...] - mean * scale                          # [1, Th]

    # ---- BN affine + ReLU ----
    h = jnp.maximum(h * scale + shift, 0.0)                       # [B, Th]

    # ---- Linear 2 partial product, accumulated in the resident f32 out block ----
    out_ref[...] += jnp.dot(h.astype(w2_ref.dtype), w2_ref[...],
                            preferred_element_type=jnp.float32)

    @pl.when(k == pl.num_programs(1) - 1)
    def _():
        out_ref[...] += b2_ref[...]


@functools.partial(
    jax.jit,
    static_argnames=("hidden_tile", "proj_splits", "vmem_limit_bytes"))
def mlp_head(x, w1, b1, gamma, beta, w2, b2, *,
             hidden_tile=512, proj_splits=None, vmem_limit_bytes=None):
    """Forward pass of MLPHead.

    x:  [B, in_dim] f32
    w1: [in_dim, hidden] (torch W1^T), b1: [1, hidden] (unused: cancelled by train-mode BN)
    gamma, beta: BatchNorm1d affine params, [1, hidden]
    w2: [hidden, proj] (torch W2^T), b2: [1, proj]
    Returns [B, proj] f32.
    """
    del b1  # cancelled by training-mode BN mean subtraction (see kernel comment).

    B, in_dim = x.shape
    hidden = w1.shape[1]
    proj = w2.shape[1]

    kind = _tpu_kind()
    if vmem_limit_bytes is None:
        vmem_limit_bytes = _default_vmem_limit_bytes(kind)

    # ---- Tile derivation (all lane-dense multiples of 128). ----
    hidden_pad0 = _round_up(hidden, LANE)
    proj_pad0 = _round_up(proj, LANE)

    if proj_splits is None:
        proj_splits = _default_proj_splits(kind, proj_pad0)
    proj_splits = max(1, min(int(proj_splits), proj_pad0 // LANE))

    # Projection tile covers the whole (padded) projection by default (num_j=1),
    # so x@w1 and the w1 HBM stream are never duplicated across proj tiles.
    tp = _round_up(pl.cdiv(proj_pad0, proj_splits), LANE)
    proj_pad = tp * proj_splits
    num_j = proj_splits

    th = _round_up(min(hidden_tile, hidden_pad0), LANE)
    hidden_pad = _round_up(hidden, th)
    num_k = hidden_pad // th

    f32 = jnp.float32
    gamma = jnp.reshape(gamma, (1, -1)).astype(f32)
    beta = jnp.reshape(beta, (1, -1)).astype(f32)
    b2 = jnp.reshape(b2, (1, -1)).astype(f32)

    # Zero-pad hidden / proj so every tile is full; padded hidden columns produce
    # h == 0 and the padded w2 rows/cols are zero, so they contribute nothing.
    # The batch dimension is never padded (BN needs true full-batch statistics).
    w1p = jnp.pad(w1, ((0, 0), (0, hidden_pad - hidden))).astype(jnp.bfloat16)
    gammap = jnp.pad(gamma, ((0, 0), (0, hidden_pad - hidden)))
    betap = jnp.pad(beta, ((0, 0), (0, hidden_pad - hidden)))
    w2p = jnp.pad(w2, ((0, hidden_pad - hidden), (0, proj_pad - proj))).astype(jnp.bfloat16)
    b2p = jnp.pad(b2, ((0, 0), (0, proj_pad - proj)))
    xb = x.astype(jnp.bfloat16)  # cast at the MXU boundary; BN math stays f32 in-kernel.

    grid_spec = pltpu.PrefetchScalarGridSpec(
        num_scalar_prefetch=0,
        grid=(num_j, num_k),
        in_specs=[
            # x is resident for the whole grid -> single-buffer it (saves
            # B*in_dim*2 bytes of VMEM, critical on v7x's 64 MiB).
            pl.BlockSpec((B, in_dim), lambda j, k: (0, 0),
                         pipeline_mode=pl.Buffered(1)),
            pl.BlockSpec((in_dim, th), lambda j, k: (0, k)),   # w1 column slab
            pl.BlockSpec((1, th), lambda j, k: (0, k)),        # gamma slab
            pl.BlockSpec((1, th), lambda j, k: (0, k)),        # beta slab
            pl.BlockSpec((th, tp), lambda j, k: (k, j)),       # w2 tile
            pl.BlockSpec((1, tp), lambda j, k: (0, j)),        # b2 tile
        ],
        # f32 output block; index constant over k -> stays resident and doubles
        # as the K-reduction accumulator (no VMEM scratch, no final copy).
        out_specs=pl.BlockSpec((B, tp), lambda j, k: (0, j)),
    )

    flops = (2 * B * in_dim * hidden_pad * num_j        # x @ w1 (per proj split)
             + 2 * B * hidden_pad * proj_pad            # relu(bn(h)) @ w2
             + 8 * B * hidden_pad * num_j)              # BN / ReLU epilogue (approx)
    bytes_accessed = (xb.size * 2 + w1p.size * 2 * num_j + w2p.size * 2
                      + B * proj_pad * 4
                      + (gammap.size + betap.size + b2p.size) * 4)
    cost = pl.CostEstimate(flops=flops,
                           transcendentals=hidden_pad * num_j,
                           bytes_accessed=bytes_accessed)

    out_pad = pl.pallas_call(
        mlp_head_kernel,
        out_shape=jax.ShapeDtypeStruct((B, proj_pad), jnp.float32),
        grid_spec=grid_spec,
        compiler_params=pltpu.CompilerParams(
            dimension_semantics=("parallel", "arbitrary"),
            vmem_limit_bytes=vmem_limit_bytes),
        cost_estimate=cost,
    )(xb, w1p, gammap, betap, w2p, b2p)

    return out_pad[:, :proj]


def init_params(key, in_dim, hidden_size, projection_size):
    """Deterministic synthetic init (PyTorch-Linear-like uniform ranges)."""
    k1, k2, k3, k4 = jax.random.split(key, 4)
    lim1 = 1.0 / jnp.sqrt(in_dim)
    lim2 = 1.0 / jnp.sqrt(hidden_size)
    # Weights stored as [in, out] (i.e. torch W^T) so the kernel does x @ W.
    w1 = jax.random.uniform(k1, (in_dim, hidden_size), jnp.float32, -lim1, lim1)
    b1 = jax.random.uniform(k2, (1, hidden_size), jnp.float32, -lim1, lim1)
    gamma = jnp.ones((1, hidden_size), jnp.float32)   # BatchNorm1d weight init
    beta = jnp.zeros((1, hidden_size), jnp.float32)   # BatchNorm1d bias init
    w2 = jax.random.uniform(k3, (hidden_size, projection_size), jnp.float32, -lim2, lim2)
    b2 = jax.random.uniform(k4, (1, projection_size), jnp.float32, -lim2, lim2)
    return w1, b1, gamma, beta, w2, b2


if __name__ == "__main__":
    # Small shapes consistent with MLPHead(in_dim, hidden_size, projection_size).
    B, in_dim, hidden_size, projection_size = 16, 64, 256, 64

    key = jax.random.PRNGKey(0)
    kx, kp = jax.random.split(key)
    x = jax.random.normal(kx, (B, in_dim), jnp.float32)
    params = init_params(kp, in_dim, hidden_size, projection_size)

    # Pure-JAX reference (module semantics, with the same bf16-at-MXU quantization).
    w1, b1, gamma, beta, w2, b2 = params
    xr = x.astype(jnp.bfloat16).astype(jnp.float32)
    w1r = w1.astype(jnp.bfloat16).astype(jnp.float32)
    w2r = w2.astype(jnp.bfloat16).astype(jnp.float32)
    h = xr @ w1r + b1                       # reference keeps b1; train-mode BN cancels it
    mu = h.mean(axis=0, keepdims=True)
    var = ((h - mu) ** 2).mean(axis=0, keepdims=True)
    h = (h - mu) * jax.lax.rsqrt(var + EPS) * gamma + beta
    h = jnp.maximum(h, 0.0)
    ref = h.astype(jnp.bfloat16).astype(jnp.float32) @ w2r + b2

    # 1) hidden_tile=128 -> 2 hidden tiles: exercises the K-reduction into out_ref.
    out = mlp_head(x, *params, hidden_tile=128)
    jax.block_until_ready(out)
    assert out.shape == (B, projection_size)
    err = float(jnp.max(jnp.abs(out - ref)))
    assert jnp.allclose(out, ref, atol=1e-2, rtol=1e-2), f"max abs err {err}"

    # 2) Default tiling (single k step, num_j=1): the production fast path.
    out2 = mlp_head(x, *params)
    jax.block_until_ready(out2)
    err2 = float(jnp.max(jnp.abs(out2 - ref)))
    assert jnp.allclose(out2, ref, atol=1e-2, rtol=1e-2), f"max abs err {err2}"

    print("KERNEL_OK")
</pallas_src>

<mosaic_0001>
module attributes {stable_mosaic.version = 11 : i64} {
  func.func @mlp_head_kernel(%arg0: i32, %arg1: i32, %arg2: memref<16x64xbf16, #tpu.memory_space<vmem>>, %arg3: memref<64x128xbf16, #tpu.memory_space<vmem>>, %arg4: memref<1x128xf32, #tpu.memory_space<vmem>>, %arg5: memref<1x128xf32, #tpu.memory_space<vmem>>, %arg6: memref<128x128xbf16, #tpu.memory_space<vmem>>, %arg7: memref<1x128xf32, #tpu.memory_space<vmem>>, %arg8: memref<16x128xf32, #tpu.memory_space<vmem>>) attributes {dimension_semantics = [#tpu.dimension_semantics<parallel>, #tpu.dimension_semantics<arbitrary>], iteration_bounds = array<i64: 1, 2>, scalar_prefetch = 0 : i64, scratch_operands = 0 : i64, tpu.core_type = #tpu.core_type<tc>, window_params = [{pipeline_mode = #tpu.pipeline_mode<synchronous>, transform_indices = @transform_0, window_bounds = array<i64: 16, 64>}, {transform_indices = @transform_1, window_bounds = array<i64: 64, 128>}, {transform_indices = @transform_2, window_bounds = array<i64: 1, 128>}, {transform_indices = @transform_3, window_bounds = array<i64: 1, 128>}, {transform_indices = @transform_4, window_bounds = array<i64: 128, 128>}, {transform_indices = @transform_5, window_bounds = array<i64: 1, 128>}, {transform_indices = @transform_6, window_bounds = array<i64: 16, 128>}]} {
    %c0_i32 = arith.constant 0 : i32
    %0 = arith.cmpi eq, %arg1, %c0_i32 : i32
    %1 = arith.extui %0 : i1 to i32
    %c0_i32_0 = arith.constant 0 : i32
    %2 = arith.cmpi ne, %1, %c0_i32_0 : i32
    scf.if %2 {
      %cst_23 = arith.constant 0.000000e+00 : f32
      %43 = vector.broadcast %cst_23 : f32 to vector<16x128xf32>
      %c0_24 = arith.constant 0 : index
      %c0_25 = arith.constant 0 : index
      %44 = vector.load %arg8[%c0_24, %c0_25] : memref<16x128xf32, #tpu.memory_space<vmem>>, vector<16x128xf32>
      tpu.vector_store %arg8[%c0_24, %c0_25], %43 {strides = array<i32>} : memref<16x128xf32, #tpu.memory_space<vmem>>, vector<16x128xf32>,
    } else {
    }
    %c0 = arith.constant 0 : index
    %c0_1 = arith.constant 0 : index
    %3 = vector.load %arg2[%c0, %c0_1] : memref<16x64xbf16, #tpu.memory_space<vmem>>, vector<16x64xbf16>
    %c0_2 = arith.constant 0 : index
    %c0_3 = arith.constant 0 : index
    %4 = vector.load %arg3[%c0_2, %c0_3] : memref<64x128xbf16, #tpu.memory_space<vmem>>, vector<64x128xbf16>
    %cst = arith.constant dense<0.000000e+00> : vector<16x128xf32>
    %5 = tpu.matmul %3, %4, %cst {dimension_numbers = #tpu.dot_dimension_numbers<[1], [0], [0], [1], [0, 0, 1, 1], [], []>} : vector<16x64xbf16>, vector<64x128xbf16>, vector<16x128xf32> -> vector<16x128xf32>
    %cst_4 = arith.constant 1.000000e+00 : f32
    %cst_5 = arith.constant 1.600000e+01 : f32
    %6 = arith.divf %cst_4, %cst_5 : f32
    %cst_6 = arith.constant dense<0.000000e+00> : vector<128xf32>
    %7 = vector.multi_reduction <add>, %5, %cst_6 [0] : vector<16x128xf32> to vector<128xf32>
    %8 = vector.shape_cast %7 : vector<128xf32> to vector<1x128xf32>
    %9 = vector.broadcast %6 : f32 to vector<1x128xf32>
    %10 = arith.mulf %8, %9 : vector<1x128xf32>
    %11 = arith.mulf %5, %5 : vector<16x128xf32>
    %cst_7 = arith.constant dense<0.000000e+00> : vector<128xf32>
    %12 = vector.multi_reduction <add>, %11, %cst_7 [0] : vector<16x128xf32> to vector<128xf32>
    %13 = vector.shape_cast %12 : vector<128xf32> to vector<1x128xf32>
    %14 = vector.broadcast %6 : f32 to vector<1x128xf32>
    %15 = arith.mulf %13, %14 : vector<1x128xf32>
    %16 = arith.mulf %10, %10 : vector<1x128xf32>
    %17 = arith.subf %15, %16 : vector<1x128xf32>
    %cst_8 = arith.constant 0.000000e+00 : f32
    %18 = vector.broadcast %cst_8 : f32 to vector<1x128xf32>
    %19 = arith.maximumf %17, %18 : vector<1x128xf32>
    %cst_9 = arith.constant 9.99999974E-6 : f32
    %20 = vector.broadcast %cst_9 : f32 to vector<1x128xf32>
    %21 = arith.addf %19, %20 : vector<1x128xf32>
    %22 = math.rsqrt %21 : vector<1x128xf32>
    %c0_10 = arith.constant 0 : index
    %c0_11 = arith.constant 0 : index
    %23 = vector.load %arg4[%c0_10, %c0_11] : memref<1x128xf32, #tpu.memory_space<vmem>>, vector<1x128xf32>
    %24 = arith.mulf %22, %23 : vector<1x128xf32>
    %c0_12 = arith.constant 0 : index
    %c0_13 = arith.constant 0 : index
    %25 = vector.load %arg5[%c0_12, %c0_13] : memref<1x128xf32, #tpu.memory_space<vmem>>, vector<1x128xf32>
    %26 = arith.mulf %10, %24 : vector<1x128xf32>
    %27 = arith.subf %25, %26 : vector<1x128xf32>
    %28 = vector.broadcast %24 : vector<1x128xf32> to vector<16x128xf32>
    %29 = arith.mulf %5, %28 : vector<16x128xf32>
    %30 = vector.broadcast %27 : vector<1x128xf32> to vector<16x128xf32>
    %31 = arith.addf %29, %30 : vector<16x128xf32>
    %cst_14 = arith.constant 0.000000e+00 : f32
    %32 = vector.broadcast %cst_14 : f32 to vector<16x128xf32>
    %33 = arith.maximumf %31, %32 : vector<16x128xf32>
    %c0_15 = arith.constant 0 : index
    %c0_16 = arith.constant 0 : index
    %34 = vector.load %arg8[%c0_15, %c0_16] : memref<16x128xf32, #tpu.memory_space<vmem>>, vector<16x128xf32>
    %35 = arith.truncf %33 : vector<16x128xf32> to vector<16x128xbf16>
    %c0_17 = arith.constant 0 : index
    %c0_18 = arith.constant 0 : index
    %36 = vector.load %arg6[%c0_17, %c0_18] : memref<128x128xbf16, #tpu.memory_space<vmem>>, vector<128x128xbf16>
    %cst_19 = arith.constant dense<0.000000e+00> : vector<16x128xf32>
    %37 = tpu.matmul %35, %36, %cst_19 {dimension_numbers = #tpu.dot_dimension_numbers<[1], [0], [0], [1], [0, 0, 1, 1], [], []>} : vector<16x128xbf16>, vector<128x128xbf16>, vector<16x128xf32> -> vector<16x128xf32>
    %38 = arith.addf %34, %37 : vector<16x128xf32>
    %c0_20 = arith.constant 0 : index
    %c0_21 = arith.constant 0 : index
    %39 = vector.load %arg8[%c0_20, %c0_21] : memref<16x128xf32, #tpu.memory_space<vmem>>, vector<16x128xf32>
    tpu.vector_store %arg8[%c0_20, %c0_21], %38 {strides = array<i32>} : memref<16x128xf32, #tpu.memory_space<vmem>>, vector<16x128xf32>,
    %c1_i32 = arith.constant 1 : i32
    %40 = arith.cmpi eq, %arg1, %c1_i32 : i32
    %41 = arith.extui %40 : i1 to i32
    %c0_i32_22 = arith.constant 0 : i32
    %42 = arith.cmpi ne, %41, %c0_i32_22 : i32
    scf.if %42 {
      %c0_23 = arith.constant 0 : index
      %c0_24 = arith.constant 0 : index
      %43 = vector.load %arg8[%c0_23, %c0_24] : memref<16x128xf32, #tpu.memory_space<vmem>>, vector<16x128xf32>
      %c0_25 = arith.constant 0 : index
      %c0_26 = arith.constant 0 : index
      %44 = vector.load %arg7[%c0_25, %c0_26] : memref<1x128xf32, #tpu.memory_space<vmem>>, vector<1x128xf32>
      %45 = vector.broadcast %44 : vector<1x128xf32> to vector<16x128xf32>
      %46 = arith.addf %43, %45 : vector<16x128xf32>
      %c0_27 = arith.constant 0 : index
      %c0_28 = arith.constant 0 : index
      %47 = vector.load %arg8[%c0_27, %c0_28] : memref<16x128xf32, #tpu.memory_space<vmem>>, vector<16x128xf32>
      tpu.vector_store %arg8[%c0_27, %c0_28], %46 {strides = array<i32>} : memref<16x128xf32, #tpu.memory_space<vmem>>, vector<16x128xf32>,
    } else {
    }
    return
  }
  func.func @transform_0(%arg0: i32, %arg1: i32) -> (i32, i32) {
    %c0_i32 = arith.constant 0 : i32
    %c0_i32_0 = arith.constant 0 : i32
    %c0_i32_1 = arith.constant 0 : i32
    return %c0_i32, %c0_i32_0 : i32, i32
  }
  func.func @transform_1(%arg0: i32, %arg1: i32) -> (i32, i32) {
    %c0_i32 = arith.constant 0 : i32
    %c0_i32_0 = arith.constant 0 : i32
    return %c0_i32, %arg1 : i32, i32
  }
  func.func @transform_2(%arg0: i32, %arg1: i32) -> (i32, i32) {
    %c0_i32 = arith.constant 0 : i32
    %c0_i32_0 = arith.constant 0 : i32
    return %c0_i32, %arg1 : i32, i32
  }
  func.func @transform_3(%arg0: i32, %arg1: i32) -> (i32, i32) {
    %c0_i32 = arith.constant 0 : i32
    %c0_i32_0 = arith.constant 0 : i32
    return %c0_i32, %arg1 : i32, i32
  }
  func.func @transform_4(%arg0: i32, %arg1: i32) -> (i32, i32) {
    %c0_i32 = arith.constant 0 : i32
    return %arg1, %arg0 : i32, i32
  }
  func.func @transform_5(%arg0: i32, %arg1: i32) -> (i32, i32) {
    %c0_i32 = arith.constant 0 : i32
    %c0_i32_0 = arith.constant 0 : i32
    return %c0_i32, %arg0 : i32, i32
  }
  func.func @transform_6(%arg0: i32, %arg1: i32) -> (i32, i32) {
    %c0_i32 = arith.constant 0 : i32
    %c0_i32_0 = arith.constant 0 : i32
    return %c0_i32, %arg0 : i32, i32
  }
}

</mosaic_0001>

<llo_original>
// kernel: mlp_head.1
$region0: #{mlp_head.1}
  #allocation0 [shape = 'u32[]', space=smem, size = 0x4, offset = 0x4, fixed_abs, tag = 'smem constant byte address 0x4 - core index']
  #allocation1 [shape = 'u32[72,128]{1,0:T(1,128)}', space=vmem, size = 0x9000, scoped, tag = 'internal scratch']
  %s0 = inlined_call_operand.vmem [shape: bf16[16,64], index: 0, kind: input, shape index: {}]
  %s1 = inlined_call_operand.vmem [shape: bf16[64,256], index: 1, kind: input, shape index: {}]
  %s2 = inlined_call_operand.vmem [shape: f32[1,256], index: 2, kind: input, shape index: {}]
  %s3 = inlined_call_operand.vmem [shape: f32[1,256], index: 3, kind: input, shape index: {}]
  %s4 = inlined_call_operand.vmem [shape: bf16[256,128], index: 4, kind: input, shape index: {}]
  %s5 = inlined_call_operand.vmem [shape: f32[1,128], index: 5, kind: input, shape index: {}]
  %s6 = inlined_call_operand.hbm [shape: f32[16,128], index: 6, kind: output, shape index: {}]
  %s7 = sld [smem:[#allocation0]]
  $region106: #{mlp_head.1} parent=0
    _
  %s9 = ssub.s32 1, %s7
  %s10 = scalar_select 0, %s9, %s7
  $region1: #{mlp_head.1} parent=0
    #allocation2 [shape = 'u8[32768]{0}', space=vmem, size = 0x8000, scoped, tag = 'input window, operand 1']
    #allocation3 [shape = 'u8[8192]{0}', space=vmem, size = 0x2000, scoped, tag = 'output window, operand 0, single buffered']
    #allocation4 [shape = 's32[2]{0}', space=sflag, size = 0x8, scoped, tag = 'scoped memory for mlp_head.1']
    %11 = vsyncpa [#allocation4], 0
    loop: start=0, step=1, limit=4
    $region2: #{mlp_head.1} parent=1 // loop_pre_header
      _
    $region3: #{mlp_head.1} parent=1 // loop_header
      %s13 = sphi 0, %s17
      %p14 = scmp.ge.s32.totalorder %s13, 4
      %s20 = sphi 0, %s32
      %s21 = sphi 0, %s28
      %s22 = sphi 0, %s20
      %s23 = sphi 0, %s21
      %s24 = sphi 0, %s22
      %s25 = sphi 0, %s23
      %s33 = sphi 0, %s33
      %s35 = sphi 0, %s33
      %s36 = sphi 0, %s35
      %s50 = sphi 0, %s36
      %s56 = sphi 0, %s58
      %s59 = sphi 0, %s56
      %s60 = sphi 0, %s59
      %s76 = sphi 0, %s60
      %s82 = sphi 0, %s84
      %s85 = sphi 0, %s82
      %s86 = sphi 0, %s85
      %s102 = sphi 0, %s86
      %s108 = sphi 0, %s110
      %s111 = sphi 0, %s108
      %s112 = sphi 0, %s111
      %s128 = sphi 0, %s112
      %s136 = sphi 0, %s138
      %s139 = sphi 0, %s136
      %s140 = sphi 0, %s139
      %s156 = sphi 0, %s140
      %s162 = sphi 0, %s164
      %s165 = sphi 0, %s162
      %s166 = sphi 0, %s165
      %s182 = sphi 0, %s166
      %s188 = sphi 0, %s190
      %s191 = sphi 0, %s188
      %s192 = sphi 0, %s191
      %s208 = sphi 0, %s192
    $region4: #{mlp_head.1} parent=1 // loop_header_branch
      %16 = sbr.rel (%p14) target = $region8
    $region5: #{mlp_head.1} parent=1 // loop_body
      %s18 = ssub.s32 %s13, 1
      %s19 = ssub.s32 %s13, 2
      %s26 = sadd.s32 1, %s21
      %p27 = scmp.ge.s32.totalorder %s26, 2
      %s28 = scalar_select %p27, 0, %s26
      %s29 = sadd.s32 1, %s20
      %s30 = scalar_select %p27, %s29, %s20
      %p31 = scmp.ge.s32.totalorder %s30, 1
      %s32 = scalar_select %p31, 0, %s30
      %s34 = sadd.s32 %s33, 1
      %p37 = scmp.eq.s32.totalorder %s13, 1
      %p38 = scmp.ne.s32.totalorder %s33, %s35
      %p39 = scmp.eq.s32.totalorder %s13, 0
      %p40 = por %p38, %p39
      %p41 = scmp.ne.s32.totalorder %s33, %s35
      %p42 = scmp.eq.s32.totalorder %s18, 1
      %p43 = por %p41, %p42
      %p44 = scmp.ne.s32.totalorder %s35, %s36
      %p45 = scmp.eq.s32.totalorder %s18, 0
      %p46 = por %p44, %p45
      %p47 = scmp.ne.s32.totalorder %s35, %s36
      %p48 = scmp.eq.s32.totalorder %s19, 1
      %p49 = por %p47, %p48
      %p51 = scmp.ne.s32.totalorder %s36, %s50
      %p52 = scmp.eq.s32.totalorder %s19, 0
      %p53 = por %p51, %p52
      %s54 = ssub.s32 %s21, %s28
      %p55 = scmp.eq.s32.totalorder %s54, 0
      %s57 = sadd.s32 %s56, 1
      %s58 = scalar_select %p55, %s56, %s57
      %p61 = pneg %p55
      %p62 = scmp.eq.s32.totalorder %s13, 1
      %p63 = por %p61, %p62
      %p64 = scmp.ne.s32.totalorder %s56, %s59
      %p65 = scmp.eq.s32.totalorder %s13, 0
      %p66 = por %p64, %p65
      %p67 = scmp.ne.s32.totalorder %s56, %s59
      %p68 = scmp.eq.s32.totalorder %s18, 1
      %p69 = por %p67, %p68
      %p70 = scmp.ne.s32.totalorder %s59, %s60
      %p71 = scmp.eq.s32.totalorder %s18, 0
      %p72 = por %p70, %p71
      %p73 = scmp.ne.s32.totalorder %s59, %s60
      %p74 = scmp.eq.s32.totalorder %s19, 1
      %p75 = por %p73, %p74
      %p77 = scmp.ne.s32.totalorder %s60, %s76
      %p78 = scmp.eq.s32.totalorder %s19, 0
      %p79 = por %p77, %p78
      %s80 = ssub.s32 %s21, %s28
      %p81 = scmp.eq.s32.totalorder %s80, 0
      %s83 = sadd.s32 %s82, 1
      %s84 = scalar_select %p81, %s82, %s83
      %p87 = pneg %p81
      %p88 = scmp.eq.s32.totalorder %s13, 1
      %p89 = por %p87, %p88
      %p90 = scmp.ne.s32.totalorder %s82, %s85
      %p91 = scmp.eq.s32.totalorder %s13, 0
      %p92 = por %p90, %p91
      %p93 = scmp.ne.s32.totalorder %s82, %s85
      %p94 = scmp.eq.s32.totalorder %s18, 1
      %p95 = por %p93, %p94
      %p96 = scmp.ne.s32.totalorder %s85, %s86
      %p97 = scmp.eq.s32.totalorder %s18, 0
      %p98 = por %p96, %p97
      %p99 = scmp.ne.s32.totalorder %s85, %s86
      %p100 = scmp.eq.s32.totalorder %s19, 1
      %p101 = por %p99, %p100
      %p103 = scmp.ne.s32.totalorder %s86, %s102
      %p104 = scmp.eq.s32.totalorder %s19, 0
      %p105 = por %p103, %p104
      %s106 = ssub.s32 %s21, %s28
      %p107 = scmp.eq.s32.totalorder %s106, 0
      %s109 = sadd.s32 %s108, 1
      %s110 = scalar_select %p107, %s108, %s109
      %p113 = pneg %p107
      %p114 = scmp.eq.s32.totalorder %s13, 1
      %p115 = por %p113, %p114
      %p116 = scmp.ne.s32.totalorder %s108, %s111
      %p117 = scmp.eq.s32.totalorder %s13, 0
      %p118 = por %p116, %p117
      %p119 = scmp.ne.s32.totalorder %s108, %s111
      %p120 = scmp.eq.s32.totalorder %s18, 1
      %p121 = por %p119, %p120
      %p122 = scmp.ne.s32.totalorder %s111, %s112
      %p123 = scmp.eq.s32.totalorder %s18, 0
      %p124 = por %p122, %p123
      %p125 = scmp.ne.s32.totalorder %s111, %s112
      %p126 = scmp.eq.s32.totalorder %s19, 1
      %p127 = por %p125, %p126
      %p129 = scmp.ne.s32.totalorder %s112, %s128
      %p130 = scmp.eq.s32.totalorder %s19, 0
      %p131 = por %p129, %p130
      %s132 = ssub.s32 %s21, %s28
      %s133 = ssub.s32 %s20, %s32
      %s134 = sor.u32 %s132, %s133
      %p135 = scmp.eq.s32.totalorder %s134, 0
      %s137 = sadd.s32 %s136, 1
      %s138 = scalar_select %p135, %s136, %s137
      %p141 = pneg %p135
      %p142 = scmp.eq.s32.totalorder %s13, 1
      %p143 = por %p141, %p142
      %p144 = scmp.ne.s32.totalorder %s136, %s139
      %p145 = scmp.eq.s32.totalorder %s13, 0
      %p146 = por %p144, %p145
      %p147 = scmp.ne.s32.totalorder %s136, %s139
      %p148 = scmp.eq.s32.totalorder %s18, 1
      %p149 = por %p147, %p148
      %p150 = scmp.ne.s32.totalorder %s139, %s140
      %p151 = scmp.eq.s32.totalorder %s18, 0
      %p152 = por %p150, %p151
      %p153 = scmp.ne.s32.totalorder %s139, %s140
      %p154 = scmp.eq.s32.totalorder %s19, 1
      %p155 = por %p153, %p154
      %p157 = scmp.ne.s32.totalorder %s140, %s156
      %p158 = scmp.eq.s32.totalorder %s19, 0
      %p159 = por %p157, %p158
      %s160 = ssub.s32 %s20, %s32
      %p161 = scmp.eq.s32.totalorder %s160, 0
      %s163 = sadd.s32 %s162, 1
      %s164 = scalar_select %p161, %s162, %s163
      %p167 = pneg %p161
      %p168 = scmp.eq.s32.totalorder %s13, 1
      %p169 = por %p167, %p168
      %p170 = scmp.ne.s32.totalorder %s162, %s165
      %p171 = scmp.eq.s32.totalorder %s13, 0
      %p172 = por %p170, %p171
      %p173 = scmp.ne.s32.totalorder %s162, %s165
      %p174 = scmp.eq.s32.totalorder %s18, 1
      %p175 = por %p173, %p174
      %p176 = scmp.ne.s32.totalorder %s165, %s166
      %p177 = scmp.eq.s32.totalorder %s18, 0
      %p178 = por %p176, %p177
      %p179 = scmp.ne.s32.totalorder %s165, %s166
      %p180 = scmp.eq.s32.totalorder %s19, 1
      %p181 = por %p179, %p180
      %p183 = scmp.ne.s32.totalorder %s166, %s182
      %p184 = scmp.eq.s32.totalorder %s19, 0
      %p185 = por %p183, %p184
      %s186 = ssub.s32 %s20, %s32
      %p187 = scmp.eq.s32.totalorder %s186, 0
      %s189 = sadd.s32 %s188, 1
      %s190 = scalar_select %p187, %s188, %s189
      %p193 = pneg %p187
      %p194 = scmp.eq.s32.totalorder %s13, 1
      %p195 = por %p193, %p194
      %p196 = scmp.ne.s32.totalorder %s188, %s191
      %p197 = scmp.eq.s32.totalorder %s13, 0
      %p198 = por %p196, %p197
      %p199 = scmp.ne.s32.totalorder %s188, %s191
      %p200 = scmp.eq.s32.totalorder %s18, 1
      %p201 = por %p199, %p200
      %p202 = scmp.ne.s32.totalorder %s191, %s192
      %p203 = scmp.eq.s32.totalorder %s18, 0
      %p204 = por %p202, %p203
      %p205 = scmp.ne.s32.totalorder %s191, %s192
      %p206 = scmp.eq.s32.totalorder %s19, 1
      %p207 = por %p205, %p206
      %p209 = scmp.ne.s32.totalorder %s192, %s208
      %p210 = scmp.eq.s32.totalorder %s19, 0
      %p211 = por %p209, %p210
      %p212 = scmp.le.s32.totalorder 1, %s13
      %p213 = scmp.lt.s32.totalorder %s13, 3
      %p214 = pnand %p212, %p213
      %p215 = pneg %p214
      // Predicated region
      $region9: #{mlp_head.1} parent=5 // pred_check
        _
      $region10: #{mlp_head.1} parent=5 // pred_check_branch
        %217 = sbr.rel (%p214) target = $region12
      $region11: #{mlp_head.1} parent=5 // pred_region
        %s218 = ssub.s32 %s13, 1
        // Predicated region
        $region13: #{mlp_head.1} parent=11 // pred_check
          %p219 = pneg %p46
        $region14: #{mlp_head.1} parent=11 // pred_check_branch
          %221 = sbr.rel (%p219) target = $region16
        $region15: #{mlp_head.1} parent=11 // pred_region
          _
        $region16: #{mlp_head.1} parent=11 // pred_fallthru
          _
        // Predicated region
        $region17: #{mlp_head.1} parent=11 // pred_check
          %p222 = pneg %p178
        $region18: #{mlp_head.1} parent=11 // pred_check_branch
          %224 = sbr.rel (%p222) target = $region20
        $region19: #{mlp_head.1} parent=11 // pred_region
          %p225 = scmp.lt.s32.totalorder %s22, 0
          %s226 = scalar_select %p225, %s22, 0
          %s227 = scalar_lea.vmem %s5, %s226
        $region20: #{mlp_head.1} parent=11 // pred_fallthru
          _
      $region12: #{mlp_head.1} parent=5 // pred_fallthru
        _
      %p228 = scmp.lt.s32.totalorder %s13, 2
      // Predicated region
      $region21: #{mlp_head.1} parent=5 // pred_check
        %p229 = pneg %p228
      $region22: #{mlp_head.1} parent=5 // pred_check_branch
        %231 = sbr.rel (%p229) target = $region24
      $region23: #{mlp_head.1} parent=5 // pred_region
        // Predicated region
        $region25: #{mlp_head.1} parent=23 // pred_check
          %p232 = pneg %p66
        $region26: #{mlp_head.1} parent=23 // pred_check_branch
          %234 = sbr.rel (%p232) target = $region28
        $region27: #{mlp_head.1} parent=23 // pred_region
          %s235 = sand.u32 %s56, 1
          %s236 = sand.u32 %s56, 1
          %s237 = smul.addr %s236, 32
          %s238 = scalar_lea.vmem [#allocation2], %s237
          %s239 = smul.addr %s21, 4
          %s240 = scalar_lea.vmem %s1, %s239
          // Predicated region
          $region29: #{mlp_head.1} parent=27 // pred_check
            _
          $region30: #{mlp_head.1} parent=27 // pred_check_branch
            %242 = sbr.rel (0) target = $region32
          $region31: #{mlp_head.1} parent=27 // pred_region
            // Predicated region
            $region33: #{mlp_head.1} parent=31 // pred_check
              _
            $region34: #{mlp_head.1} parent=31 // pred_check_branch
              %244 = sbr.rel target = $region36
            $region35: #{mlp_head.1} parent=31 // pred_region
              // Predicated region
              $region48: #{mlp_head.1} parent=35 // pred_check
                _
              $region49: #{mlp_head.1} parent=35 // pred_check_branch
                %274 = sbr.rel (0) target = $region51
              $region50: #{mlp_head.1} parent=35 // pred_region
                loop: start=0, step=1, limit=1
                $region52: #{mlp_head.1} parent=50 // loop_pre_header
                  _
                $region53: #{mlp_head.1} parent=50 // loop_header
                  %s276 = sphi 0, %s280
                  %p277 = scmp.ge.s32.totalorder %s276, 1
                  %s281 = sphi %s240, %s240
                  %s282 = sphi %s238, %s238
                $region54: #{mlp_head.1} parent=50 // loop_header_branch
                  %279 = sbr.rel (%p277) target = $region58
                $region55: #{mlp_head.1} parent=50 // loop_body
                  _
                $region56: #{mlp_head.1} parent=50 // loop_footer
                  %s280 = sadd.s32 1, %s276
                $region57: #{mlp_head.1} parent=50 // loop_footer_branch
                  %275 = sbr.rel target = $region53
                $region58: #{mlp_head.1} parent=50 // loop_exit
                  _
                %s284 = ssub.s32 16, 1
                loop: start=0, step=1, limit=1
                $region59: #{mlp_head.1} parent=50 // loop_pre_header
                  _
                $region60: #{mlp_head.1} parent=50 // loop_header
                  %s286 = sphi 0, %s290
                  %p287 = scmp.ge.s32.totalorder %s286, 1
                  %s291 = sphi %s240, %s240
                  %s292 = sphi %s238, %s238
                $region61: #{mlp_head.1} parent=50 // loop_header_branch
                  %289 = sbr.rel (%p287) target = $region65
                $region62: #{mlp_head.1} parent=50 // loop_body
                  %v293 = vld [vmem:[%s291] sm:%s284]
                  %294 = vst [vmem:[%s292] sm:%s284] %v293
                  %v295 = vld [vmem:[%s291 + $0x8] sm:%s284]
                  %296 = vst [vmem:[%s292 + $0x4] sm:%s284] %v295
                  %v297 = vld [vmem:[%s291 + $0x10] sm:%s284]
                  %298 = vst [vmem:[%s292 + $0x8] sm:%s284] %v297
                  %v299 = vld [vmem:[%s291 + $0x18] sm:%s284]
                  %300 = vst [vmem:[%s292 + $0xc] sm:%s284] %v299
                  %v301 = vld [vmem:[%s291 + $0x20] sm:%s284]
                  %302 = vst [vmem:[%s292 + $0x10] sm:%s284] %v301
                  %v303 = vld [vmem:[%s291 + $0x28] sm:%s284]
                  %304 = vst [vmem:[%s292 + $0x14] sm:%s284] %v303
                  %v305 = vld [vmem:[%s291 + $0x30] sm:%s284]
                  %306 = vst [vmem:[%s292 + $0x18] sm:%s284] %v305
                  %v307 = vld [vmem:[%s291 + $0x38] sm:%s284]
                  %308 = vst [vmem:[%s292 + $0x1c] sm:%s284] %v307
                $region63: #{mlp_head.1} parent=50 // loop_footer
                  %s290 = sadd.s32 1, %s286
                $region64: #{mlp_head.1} parent=50 // loop_footer_branch
                  %285 = sbr.rel target = $region60
                $region65: #{mlp_head.1} parent=50 // loop_exit
                  _
              $region51: #{mlp_head.1} parent=35 // pred_fallthru
                _
            $region36: #{mlp_head.1} parent=31 // pred_fallthru
              _
            // Predicated region
            $region37: #{mlp_head.1} parent=31 // pred_check
              _
            $region38: #{mlp_head.1} parent=31 // pred_check_branch
              %246 = sbr.rel (0) target = $region40
            $region39: #{mlp_head.1} parent=31 // pred_region
              %s248 = ssub.s32 16, 1
              loop: start=0, step=1, limit=1
              $region41: #{mlp_head.1} parent=39 // loop_pre_header
                _
              $region42: #{mlp_head.1} parent=39 // loop_header
                %s250 = sphi 0, %s254
                %p251 = scmp.ge.s32.totalorder %s250, 1
                %s255 = sphi %s240, %s240
                %s256 = sphi %s238, %s238
              $region43: #{mlp_head.1} parent=39 // loop_header_branch
                %253 = sbr.rel (%p251) target = $region47
              $region44: #{mlp_head.1} parent=39 // loop_body
                %v257 = vld [vmem:[%s255] sm:%s248]
                %258 = vst [vmem:[%s256] sm:%s248] %v257
                %v259 = vld [vmem:[%s255 + $0x8] sm:%s248]
                %260 = vst [vmem:[%s256 + $0x4] sm:%s248] %v259
                %v261 = vld [vmem:[%s255 + $0x10] sm:%s248]
                %262 = vst [vmem:[%s256 + $0x8] sm:%s248] %v261
                %v263 = vld [vmem:[%s255 + $0x18] sm:%s248]
                %264 = vst [vmem:[%s256 + $0xc] sm:%s248] %v263
                %v265 = vld [vmem:[%s255 + $0x20] sm:%s248]
                %266 = vst [vmem:[%s256 + $0x10] sm:%s248] %v265
                %v267 = vld [vmem:[%s255 + $0x28] sm:%s248]
                %268 = vst [vmem:[%s256 + $0x14] sm:%s248] %v267
                %v269 = vld [vmem:[%s255 + $0x30] sm:%s248]
                %270 = vst [vmem:[%s256 + $0x18] sm:%s248] %v269
                %v271 = vld [vmem:[%s255 + $0x38] sm:%s248]
                %272 = vst [vmem:[%s256 + $0x1c] sm:%s248] %v271
              $region45: #{mlp_head.1} parent=39 // loop_footer
                %s254 = sadd.s32 1, %s250
              $region46: #{mlp_head.1} parent=39 // loop_footer_branch
                %249 = sbr.rel target = $region42
              $region47: #{mlp_head.1} parent=39 // loop_exit
                _
            $region40: #{mlp_head.1} parent=31 // pred_fallthru
              _
          $region32: #{mlp_head.1} parent=27 // pred_fallthru
            _
          %309 = vnop
        $region28: #{mlp_head.1} parent=23 // pred_fallthru
          _
        // Predicated region
        $region66: #{mlp_head.1} parent=23 // pred_check
          %p310 = pneg %p92
        $region67: #{mlp_head.1} parent=23 // pred_check_branch
          %312 = sbr.rel (%p310) target = $region69
        $region68: #{mlp_head.1} parent=23 // pred_region
          %p313 = scmp.lt.s32.totalorder %s21, 1
          %s314 = scalar_select %p313, %s21, 1
          %s315 = scalar_lea.vmem %s2, %s314
        $region69: #{mlp_head.1} parent=23 // pred_fallthru
          _
        // Predicated region
        $region70: #{mlp_head.1} parent=23 // pred_check
          %p316 = pneg %p118
        $region71: #{mlp_head.1} parent=23 // pred_check_branch
          %318 = sbr.rel (%p316) target = $region73
        $region72: #{mlp_head.1} parent=23 // pred_region
          %p319 = scmp.lt.s32.totalorder %s21, 1
          %s320 = scalar_select %p319, %s21, 1
          %s321 = scalar_lea.vmem %s3, %s320
        $region73: #{mlp_head.1} parent=23 // pred_fallthru
          _
        // Predicated region
        $region74: #{mlp_head.1} parent=23 // pred_check
          %p322 = pneg %p146
        $region75: #{mlp_head.1} parent=23 // pred_check_branch
          %324 = sbr.rel (%p322) target = $region77
        $region76: #{mlp_head.1} parent=23 // pred_region
          %s325 = smul.u32 16, %s21
          %p326 = scmp.lt.s32.totalorder %s325, 31
          %s327 = scalar_select %p326, %s325, 31
          %p328 = scmp.lt.s32.totalorder %s20, 0
          %s329 = scalar_select %p328, %s20, 0
          %s330 = sadd.s32 %s329, %s327
          %s331 = smul.addr %s330, 4
          %s332 = scalar_lea.vmem %s4, %s331
          %s333 = smul.u32 16, %s21
        $region77: #{mlp_head.1} parent=23 // pred_fallthru
          _
      $region24: #{mlp_head.1} parent=5 // pred_fallthru
        _
      %p334 = scmp.le.s32.totalorder 1, %s13
      %p335 = scmp.lt.s32.totalorder %s13, 3
      %p336 = pnand %p334, %p335
      %p337 = pneg %p336
      // Predicated region
      $region78: #{mlp_head.1} parent=5 // pred_check
        _
      $region79: #{mlp_head.1} parent=5 // pred_check_branch
        %339 = sbr.rel (%p336) target = $region81
      $region80: #{mlp_head.1} parent=5 // pred_region
        %s340 = ssub.s32 %s13, 1
        %s341 = sand.u32 %s59, 1
        %s342 = sand.u32 %s59, 1
        %s343 = smul.addr %s342, 32
        %s344 = scalar_lea.vmem [#allocation2], %s343
        // Predicated region
        $region82: #{mlp_head.1} parent=80 // pred_check
          %p345 = pneg %p72
        $region83: #{mlp_head.1} parent=80 // pred_check_branch
          %347 = sbr.rel (%p345) target = $region85
        $region84: #{mlp_head.1} parent=80 // pred_region
          _
        $region85: #{mlp_head.1} parent=80 // pred_fallthru
          _
        %p348 = pneg %p46
        %p349 = pneg %p43
        %s350 = sand.u32 %s59, 1
        %s351 = sand.u32 %s59, 1
        %s352 = smul.addr %s351, 32
        %s353 = scalar_lea.vmem [#allocation2], %s352
        %p354 = pneg %p72
        %p355 = pneg %p69
        %p356 = scmp.lt.s32.totalorder %s23, 1
        %s357 = scalar_select %p356, %s23, 1
        %s358 = scalar_lea.vmem %s2, %s357
        %p359 = pneg %p98
        %p360 = pneg %p95
        %p361 = scmp.lt.s32.totalorder %s23, 1
        %s362 = scalar_select %p361, %s23, 1
        %s363 = scalar_lea.vmem %s3, %s362
        %p364 = pneg %p124
        %p365 = pneg %p121
        %s366 = smul.u32 16, %s23
        %p367 = scmp.lt.s32.totalorder %s366, 31
        %s368 = scalar_select %p367, %s366, 31
        %p369 = scmp.lt.s32.totalorder %s22, 0
        %s370 = scalar_select %p369, %s22, 0
        %s371 = sadd.s32 %s370, %s368
        %s372 = smul.addr %s371, 4
        %s373 = scalar_lea.vmem %s4, %s372
        %p374 = pneg %p152
        %p375 = pneg %p149
        %p376 = scmp.lt.s32.totalorder %s22, 0
        %s377 = scalar_select %p376, %s22, 0
        %s378 = scalar_lea.vmem %s5, %s377
        %p379 = pneg %p178
        %p380 = pneg %p175
        %p381 = pneg %p204
        %p382 = pneg %p201
        %p383 = scmp.lt.s32.totalorder %s23, 1
        %s384 = scalar_select %p383, %s23, 1
        %s385 = scalar_lea.vmem %s2, %s384
        %p386 = scmp.lt.s32.totalorder %s23, 1
        %s387 = scalar_select %p386, %s23, 1
        %s388 = scalar_lea.vmem %s3, %s387
        %s389 = smul.u32 16, %s23
        %p390 = scmp.lt.s32.totalorder %s389, 31
        %s391 = scalar_select %p390, %s389, 31
        %p392 = scmp.lt.s32.totalorder %s22, 0
        %s393 = scalar_select %p392, %s22, 0
        %s394 = sadd.s32 %s393, %s391
        %s395 = smul.addr %s394, 4
        %s396 = scalar_lea.vmem %s4, %s395
        %s397 = smul.u32 16, %s23
        %p398 = scmp.lt.s32.totalorder %s22, 0
        %s399 = scalar_select %p398, %s22, 0
        %s400 = scalar_lea.vmem %s5, %s399
        %p402 = scmp.eq.s32.totalorder %s23, 0
        // Predicated region
        $region86: #{mlp_head.1} parent=80 // pred_check
          %p403 = pneg %p402
        $region87: #{mlp_head.1} parent=80 // pred_check_branch
          %405 = sbr.rel (%p403) target = $region89
        $region88: #{mlp_head.1} parent=80 // pred_region
          %406 = vst [vmem:[#allocation3] sm:$0xff] 0.0
          %407 = vst [vmem:[#allocation3 + $0x8] sm:$0xff] 0.0
        $region89: #{mlp_head.1} parent=80 // pred_fallthru
          _
        %v408 = vld [vmem:[%s0] sm:$0xf]
        %v409 = vld [vmem:[%s0 + $0x4] sm:$0xf]
        %v410 = vld [vmem:[%s344] sm:$0xf]
        %v411 = vld [vmem:[%s344 + $0x4] sm:$0xf]
        %v412 = vld [vmem:[%s344 + $0x8] sm:$0xf]
        %v413 = vld [vmem:[%s344 + $0xc] sm:$0xf]
        %v414 = vld [vmem:[%s344 + $0x10] sm:$0xf]
        %v415 = vld [vmem:[%s344 + $0x14] sm:$0xf]
        %v416 = vld [vmem:[%s344 + $0x18] sm:$0xf]
        %v417 = vld [vmem:[%s344 + $0x1c] sm:$0xf]
        %v420 = vunpack.c.l.b16 %v408
        %v421 = vunpack.c.l.b16 %v409
        %v422 = vpack.c.b16 %v421, %v420
        %v431 = vunpack.c.l.b16 %v410
        %v432 = vunpack.c.l.b16 %v411
        %v433 = vunpack.c.l.b16 %v412
        %v434 = vunpack.c.l.b16 %v413
        %v435 = vunpack.c.l.b16 %v414
        %v436 = vunpack.c.l.b16 %v415
        %v437 = vunpack.c.l.b16 %v416
        %v438 = vunpack.c.l.b16 %v417
        %v439 = vpack.c.b16 %v432, %v431
        %v440 = vpack.c.b16 %v434, %v433
        %v441 = vpack.c.b16 %v436, %v435
        %v442 = vpack.c.b16 %v438, %v437
        %vm447 = vcmask 523264
        %v449 = vsel %vm447, %v422, 0
        %451 = vmatpush.bf16.msra.mxu0 0
        %452 = vmatpush.bf16.msra.mxu0 0
        %453 = vmatpush.bf16.msra.mxu0 0
        %454 = vmatpush.bf16.msra.mxu0 0
        %455 = vmatpush.bf16.msra.mxu0 %v442
        %456 = vmatpush.bf16.msra.mxu0 %v441
        %457 = vmatpush.bf16.msra.mxu0 %v440
        %458 = vmatpush.bf16.msra.mxu0 %v439
        %459 = vmatmul.bf16.gmra.mxu0 %v449
        %v460 = vpop.f32.mrf.mxu0
        %v461 = vadd.f32 0.0, %v460
        %v462 = vpop.f32.mrf.mxu0
        %v463 = vadd.f32 0.0, %v462
        %464 = vdwg.mxu0
        %v465 = vadd.f32 %v461, %v463
        %v466 = vrot.slane %v465, 4
        %v467 = vadd.f32 %v465, %v466
        %v468 = vrot.slane %v467, 2
        %v469 = vadd.f32 %v467, %v468
        %v470 = vrot.slane %v469, 1
        %v471 = vadd.f32 %v469, %v470
        %v472 = vmul.f32 %v471, 0.0625
        %v473 = vmul.f32 %v461, %v461
        %v474 = vmul.f32 %v463, %v463
        %v475 = vadd.f32 %v473, %v474
        %v476 = vrot.slane %v475, 4
        %v477 = vadd.f32 %v475, %v476
        %v478 = vrot.slane %v477, 2
        %v479 = vadd.f32 %v477, %v478
        %v480 = vrot.slane %v479, 1
        %v481 = vadd.f32 %v479, %v480
        %v482 = vmul.f32 %v481, 0.0625
        %v483 = vmul.f32 %v472, %v472
        %v484 = vsub.f32 %v482, %v483
        %v485 = vmax.f32 %v484, 0.0
        %v486 = vadd.f32 %v485, 1e-05
        %v487 = vrsqrt.pop %v486
        %v488 = vmul.f32 %v487, %v486
        %v489 = vmul.f32 %v488, %v487
        %v490 = vmul.f32 0.5, %v489
        %v491 = vsub.f32 1.5, %v490
        %v492 = vmul.f32 %v487, %v491
        %vm493 = vweird.f32 %v486
        %vm494 = vweird.f32 %v487
        %vm495 = vmor %vm493, %vm494
        %v496 = vsel %vm495, %v487, %v492
        %v497 = vld [vmem:[%s385] sm:$0x1]
        %v498 = vmul.f32 %v496, %v497
        %v499 = vld [vmem:[%s388] sm:$0x1]
        %v500 = vmul.f32 %v472, %v498
        %v501 = vsub.f32 %v499, %v500
        %v502 = vperm.slane %v498, 0
        %v503 = vmul.f32 %v461, %v502
        %v504 = vmul.f32 %v463, %v502
        %v506 = vperm.slane %v501, 0
        %v508 = vadd.f32 %v503, %v506
        %v509 = vadd.f32 %v504, %v506
        %v510 = vmax.f32 %v508, 0.0
        %v511 = vmax.f32 %v509, 0.0
        %v512 = vld [vmem:[#allocation3] sm:$0xff]
        %v513 = vld [vmem:[#allocation3 + $0x8] sm:$0xff]
        %v514 = vpack.c.bf16 %v511, %v510
        %v515 = vld [vmem:[%s396] sm:$0xf]
        %v516 = vld [vmem:[%s396 + $0x4] sm:$0xf]
        %v517 = vld [vmem:[%s396 + $0x8] sm:$0xf]
        %v518 = vld [vmem:[%s396 + $0xc] sm:$0xf]
        %v519 = vld [vmem:[%s396 + $0x10] sm:$0xf]
        %v520 = vld [vmem:[%s396 + $0x14] sm:$0xf]
        %v521 = vld [vmem:[%s396 + $0x18] sm:$0xf]
        %v522 = vld [vmem:[%s396 + $0x1c] sm:$0xf]
        %v523 = vld [vmem:[%s396 + $0x20] sm:$0xf]
        %v524 = vld [vmem:[%s396 + $0x24] sm:$0xf]
        %v525 = vld [vmem:[%s396 + $0x28] sm:$0xf]
        %v526 = vld [vmem:[%s396 + $0x2c] sm:$0xf]
        %v527 = vld [vmem:[%s396 + $0x30] sm:$0xf]
        %v528 = vld [vmem:[%s396 + $0x34] sm:$0xf]
        %v529 = vld [vmem:[%s396 + $0x38] sm:$0xf]
        %v530 = vld [vmem:[%s396 + $0x3c] sm:$0xf]
        %v547 = vunpack.c.l.b16 %v515
        %v548 = vunpack.c.l.b16 %v516
        %v549 = vunpack.c.l.b16 %v517
        %v550 = vunpack.c.l.b16 %v518
        %v551 = vunpack.c.l.b16 %v519
        %v552 = vunpack.c.l.b16 %v520
        %v553 = vunpack.c.l.b16 %v521
        %v554 = vunpack.c.l.b16 %v522
        %v555 = vunpack.c.l.b16 %v523
        %v556 = vunpack.c.l.b16 %v524
        %v557 = vunpack.c.l.b16 %v525
        %v558 = vunpack.c.l.b16 %v526
        %v559 = vunpack.c.l.b16 %v527
        %v560 = vunpack.c.l.b16 %v528
        %v561 = vunpack.c.l.b16 %v529
        %v562 = vunpack.c.l.b16 %v530
        %v563 = vpack.c.b16 %v548, %v547
        %v564 = vpack.c.b16 %v550, %v549
        %v565 = vpack.c.b16 %v552, %v551
        %v566 = vpack.c.b16 %v554, %v553
        %v567 = vpack.c.b16 %v556, %v555
        %v568 = vpack.c.b16 %v558, %v557
        %v569 = vpack.c.b16 %v560, %v559
        %v570 = vpack.c.b16 %v562, %v561
        %579 = vmatpush.bf16.msra.mxu0 %v570
        %580 = vmatpush.bf16.msra.mxu0 %v569
        %581 = vmatpush.bf16.msra.mxu0 %v568
        %582 = vmatpush.bf16.msra.mxu0 %v567
        %583 = vmatpush.bf16.msra.mxu0 %v566
        %584 = vmatpush.bf16.msra.mxu0 %v565
        %585 = vmatpush.bf16.msra.mxu0 %v564
        %586 = vmatpush.bf16.msra.mxu0 %v563
        %587 = vmatmul.bf16.gmra.mxu0 %v514
        %v588 = vpop.f32.mrf.mxu0
        %v589 = vadd.f32 0.0, %v588
        %v590 = vpop.f32.mrf.mxu0
        %v591 = vadd.f32 0.0, %v590
        %592 = vdwg.mxu0
        %v593 = vadd.f32 %v512, %v589
        %v594 = vadd.f32 %v513, %v591
        %595 = vst [vmem:[#allocation3] sm:$0xff] %v593
        %596 = vst [vmem:[#allocation3 + $0x8] sm:$0xff] %v594
        %p597 = scmp.eq.s32.totalorder %s23, 1
        // Predicated region
        $region90: #{mlp_head.1} parent=80 // pred_check
          %p598 = pneg %p597
        $region91: #{mlp_head.1} parent=80 // pred_check_branch
          %600 = sbr.rel (%p598) target = $region93
        $region92: #{mlp_head.1} parent=80 // pred_region
          %v601 = vld [vmem:[#allocation3] sm:$0xff]
          %v602 = vld [vmem:[#allocation3 + $0x8] sm:$0xff]
          %v603 = vld [vmem:[%s400] sm:$0x1]
          %v605 = vperm.slane %v603, 0
          %v607 = vadd.f32 %v601, %v605
          %v608 = vadd.f32 %v602, %v605
          %609 = vst [vmem:[#allocation3] sm:$0xff] %v607
          %610 = vst [vmem:[#allocation3 + $0x8] sm:$0xff] %v608
        $region93: #{mlp_head.1} parent=80 // pred_fallthru
          _
        // Predicated region
        $region94: #{mlp_head.1} parent=80 // pred_check
          %p611 = pneg %p201
        $region95: #{mlp_head.1} parent=80 // pred_check_branch
          %613 = sbr.rel (%p611) target = $region97
        $region96: #{mlp_head.1} parent=80 // pred_region
          %615 = vsyncadd [#allocation4], 0
          %s616 = smul.addr %s22, 8
          %s617 = scalar_lea.hbm %s6, %s616
          %s618 = sshll.u32 [#allocation3], 4
          %s619 = int_to_ptr.vmem [resolvable:$true] %s618
          %s620 = sshll.u32 %s617, 4
          %s621 = int_to_ptr.hbm [resolvable:$true] %s620
          %626 = dma.vmem_to_hbm [thread:$0]  %s619, 256, %s621, [#allocation4], 128, 128, 8
        $region97: #{mlp_head.1} parent=80 // pred_fallthru
          _
        // Predicated region
        $region98: #{mlp_head.1} parent=80 // pred_check
          %p627 = pneg %p201
        $region99: #{mlp_head.1} parent=80 // pred_check_branch
          %629 = sbr.rel (%p627) target = $region101
        $region100: #{mlp_head.1} parent=80 // pred_region
          %631 = dma.done [#allocation4], 256
        $region101: #{mlp_head.1} parent=80 // pred_fallthru
          _
      $region81: #{mlp_head.1} parent=5 // pred_fallthru
        _
      %p632 = scmp.le.s32.totalorder 2, %s13
      // Predicated region
      $region102: #{mlp_head.1} parent=5 // pred_check
        %p633 = pneg %p632
      $region103: #{mlp_head.1} parent=5 // pred_check_branch
        %635 = sbr.rel (%p633) target = $region105
      $region104: #{mlp_head.1} parent=5 // pred_region
        %s636 = ssub.s32 %s13, 2
      $region105: #{mlp_head.1} parent=5 // pred_fallthru
        _
    $region6: #{mlp_head.1} parent=1 // loop_footer
      %s17 = sadd.s32 1, %s13
    $region7: #{mlp_head.1} parent=1 // loop_footer_branch
      %12 = sbr.rel target = $region3
    $region8: #{mlp_head.1} parent=1 // loop_exit
      _
    %637 = vsyncpa [#allocation4], 1
    %s638 = scalar_lea.sflag [#allocation4], 1
    %639 = vsyncpa %s638, 1

</llo_original>
